<compile_context>
chip_gen: v5e
topology: v5e:2x2
jax: 0.10.0
libtpu: 0.0.40
codegen_flags: <defaults>
</compile_context>

<pallas_src>
import jax
import jax.numpy as jnp
from jax.experimental import pallas as pl
from jax.experimental.pallas import tpu as pltpu

# ---- Hyper-parameters (match VIDREncoder.__init__ defaults) -----------------
INPUT_DIM = 32
LATENT_DIM = 16
HIDDEN_DIM = 32
N_HIDDEN_LAYERS = 3
BN_EPS = 1e-3
DROPOUT_P = 0.2
REPARAM_EPS = 1e-4
LEAKY_SLOPE = 0.01            # nn.LeakyReLU default negative_slope
BATCH = 8                     # rows per encoder instance (one sublane tile)
N_INSTANCES = 4               # independent encoder problems per pallas_call
NB = N_INSTANCES * BATCH      # flattened row count


def _fc_block(h, w, b, gamma, beta, aavg, bexp, drop_mask):
    """Linear -> BatchNorm1d(train, per-instance batch stats) -> LeakyReLU -> Dropout.

    h: (NB, D); aavg: (N, NB) segment-averaging matrix; bexp: (NB, N) one-hot
    expansion matrix; drop_mask already holds keep / (1 - p).
    """
    # Linear (MXU)
    h = jnp.dot(h, w, preferred_element_type=jnp.float32) + b
    # Per-instance BN stats in ONE tiny matmul: [mu | E[h^2]]  -> (N, 2H)
    stats = jnp.dot(aavg, jnp.concatenate([h, h * h], axis=-1),
                    preferred_element_type=jnp.float32)
    mu = stats[:, :HIDDEN_DIM]
    var = jnp.maximum(stats[:, HIDDEN_DIM:] - mu * mu, 0.0)    # biased batch var
    scale = jax.lax.rsqrt(var + BN_EPS) * gamma                # (N, H)
    shift = beta - mu * scale                                  # (N, H)
    # Broadcast [scale | shift] back to every row with one matmul -> (NB, 2H)
    ssf = jnp.dot(bexp, jnp.concatenate([scale, shift], axis=-1),
                  preferred_element_type=jnp.float32)
    h = h * ssf[:, :HIDDEN_DIM] + ssf[:, HIDDEN_DIM:]
    # LeakyReLU (vmul + vmax)
    h = jnp.maximum(h, LEAKY_SLOPE * h)
    # Dropout: single multiply with pre-scaled mask
    return h * drop_mask


def vidr_kernel(x_ref,                                   # (NB, D_in)
                w0_ref, b0_ref, g0_ref, be0_ref,         # first encoder block
                wf_ref, bf_ref, gf_ref, bef_ref,         # shared fclayers block
                wmv_ref, bmv_ref,                        # fused mean|log_var head
                aavg_ref,                                # (N, NB)  avg matrix
                bexp_ref,                                # (NB, N)  expand matrix
                mask_ref,                                # (n_layers, NB, H)
                noise_ref,                               # (NB, L)
                out_ref):                                # (NB, 3L) = mean|var|z
    h = x_ref[...].astype(jnp.float32)
    aavg = aavg_ref[...]
    bexp = bexp_ref[...]

    # First block: Linear(input_dim -> hidden_dim) + BN + LeakyReLU + Dropout
    h = _fc_block(h, w0_ref[...], b0_ref[...], g0_ref[...], be0_ref[...],
                  aavg, bexp, mask_ref[0])

    # (n_hidden_layers - 1) applications of the SAME shared fclayers block
    for i in range(1, N_HIDDEN_LAYERS):
        h = _fc_block(h, wf_ref[...], bf_ref[...], gf_ref[...], bef_ref[...],
                      aavg, bexp, mask_ref[i])

    # Fused heads: one matmul produces [mean | log_var]
    head = jnp.dot(h, wmv_ref[...], preferred_element_type=jnp.float32) + bmv_ref[...]
    mean = head[:, :LATENT_DIM]
    log_var = head[:, LATENT_DIM:]
    var = jnp.exp(log_var) + REPARAM_EPS
    # Normal(mean, sqrt(var)).rsample() == mean + sqrt(var) * eps, eps ~ N(0,1)
    z = mean + jnp.sqrt(var) * noise_ref[...]

    # Single store; split back into (mean, var, z) in the wrapper.
    out_ref[...] = jnp.concatenate([mean, var, z], axis=-1)


def _full_spec(shape):
    """Whole-array block, same block for the single grid step."""
    n = len(shape)
    return pl.BlockSpec(shape, lambda *_: (0,) * n)


@jax.jit
def vidr_encoder_forward(x, params, drop_masks, noise):
    """x: (N, BATCH, INPUT_DIM); drop_masks: (N, n_layers, BATCH, HIDDEN_DIM)
    (pre-scaled by 1/(1-p)); noise: (N, BATCH, LATENT_DIM) ~ N(0,1)."""
    (w0, b0, g0, be0, wf, bf, gf, bef, wm, bm, wv, bv) = params
    # Fuse the two heads into one matmul in the wrapper (free at trace time).
    wmv = jnp.concatenate([wm, wv], axis=1)        # (H, 2L)
    bmv = jnp.concatenate([bm, bv], axis=1)        # (1, 2L)

    n_inst = x.shape[0]
    assert n_inst == N_INSTANCES

    # Flatten all instances into one (NB, .) problem; keep layers leading on masks.
    x_f = x.reshape(NB, INPUT_DIM)
    mask_f = jnp.transpose(drop_masks, (1, 0, 2, 3)).reshape(
        N_HIDDEN_LAYERS, NB, HIDDEN_DIM)
    noise_f = noise.reshape(NB, LATENT_DIM)

    # Segment-average / one-hot-expand matrices for per-instance BatchNorm.
    inst_id = jnp.repeat(jnp.arange(N_INSTANCES, dtype=jnp.int32), BATCH)
    bexp = (inst_id[:, None] ==
            jnp.arange(N_INSTANCES, dtype=jnp.int32)[None, :]).astype(jnp.float32)
    aavg = bexp.T * (1.0 / BATCH)                  # (N, NB)

    out = pl.pallas_call(
        vidr_kernel,
        grid=(1,),
        out_shape=jax.ShapeDtypeStruct((NB, 3 * LATENT_DIM), jnp.float32),
        in_specs=[
            _full_spec((NB, INPUT_DIM)),                        # x
            _full_spec((INPUT_DIM, HIDDEN_DIM)),                # w0
            _full_spec((1, HIDDEN_DIM)),                        # b0
            _full_spec((1, HIDDEN_DIM)),                        # g0
            _full_spec((1, HIDDEN_DIM)),                        # be0
            _full_spec((HIDDEN_DIM, HIDDEN_DIM)),               # wf
            _full_spec((1, HIDDEN_DIM)),                        # bf
            _full_spec((1, HIDDEN_DIM)),                        # gf
            _full_spec((1, HIDDEN_DIM)),                        # bef
            _full_spec((HIDDEN_DIM, 2 * LATENT_DIM)),           # wmv
            _full_spec((1, 2 * LATENT_DIM)),                    # bmv
            _full_spec((N_INSTANCES, NB)),                      # aavg
            _full_spec((NB, N_INSTANCES)),                      # bexp
            _full_spec((N_HIDDEN_LAYERS, NB, HIDDEN_DIM)),      # drop masks
            _full_spec((NB, LATENT_DIM)),                       # noise
        ],
        out_specs=_full_spec((NB, 3 * LATENT_DIM)),
        compiler_params=pltpu.CompilerParams(
            dimension_semantics=("arbitrary",)),
    )(x_f, w0, b0, g0, be0, wf, bf, gf, bef, wmv, bmv, aavg, bexp, mask_f, noise_f)

    out = out.reshape(N_INSTANCES, BATCH, 3 * LATENT_DIM)
    mean = out[..., :LATENT_DIM]
    var = out[..., LATENT_DIM:2 * LATENT_DIM]
    z = out[..., 2 * LATENT_DIM:]
    return mean, var, z


def init_params(key):
    """Deterministic synthetic parameters (shapes match the module __init__)."""
    ks = jax.random.split(key, 8)
    s = 0.1
    # first encoder block: Linear(input_dim, hidden_dim) + BatchNorm1d(hidden_dim)
    w0 = s * jax.random.normal(ks[0], (INPUT_DIM, HIDDEN_DIM), jnp.float32)
    b0 = s * jax.random.normal(ks[1], (1, HIDDEN_DIM), jnp.float32)
    g0 = jnp.ones((1, HIDDEN_DIM), jnp.float32)          # BN weight (default init)
    be0 = jnp.zeros((1, HIDDEN_DIM), jnp.float32)        # BN bias
    # shared fclayers block: Linear(hidden_dim, hidden_dim) + BatchNorm1d(hidden_dim)
    wf = s * jax.random.normal(ks[2], (HIDDEN_DIM, HIDDEN_DIM), jnp.float32)
    bf = s * jax.random.normal(ks[3], (1, HIDDEN_DIM), jnp.float32)
    gf = jnp.ones((1, HIDDEN_DIM), jnp.float32)
    bef = jnp.zeros((1, HIDDEN_DIM), jnp.float32)
    # heads
    wm = s * jax.random.normal(ks[4], (HIDDEN_DIM, LATENT_DIM), jnp.float32)
    bm = s * jax.random.normal(ks[5], (1, LATENT_DIM), jnp.float32)
    wv = s * jax.random.normal(ks[6], (HIDDEN_DIM, LATENT_DIM), jnp.float32)
    bv = s * jax.random.normal(ks[7], (1, LATENT_DIM), jnp.float32)
    return (w0, b0, g0, be0, wf, bf, gf, bef, wm, bm, wv, bv)


def vidr_reference(x, params, drop_masks, noise):
    """Pure-JAX reference with identical randoms (for a sanity check)."""
    (w0, b0, g0, be0, wf, bf, gf, bef, wm, bm, wv, bv) = params

    def block(h, w, b, gamma, beta, m):
        h = h @ w + b
        mu = jnp.mean(h, axis=0, keepdims=True)
        var = jnp.mean((h - mu) ** 2, axis=0, keepdims=True)
        h = (h - mu) / jnp.sqrt(var + BN_EPS) * gamma + beta
        h = jnp.where(h >= 0.0, h, LEAKY_SLOPE * h)
        return h * m

    def one(xi, mi, ni):
        h = block(xi, w0, b0, g0, be0, mi[0])
        for i in range(1, N_HIDDEN_LAYERS):
            h = block(h, wf, bf, gf, bef, mi[i])
        mean = h @ wm + bm
        log_var = h @ wv + bv
        var = jnp.exp(log_var) + REPARAM_EPS
        z = mean + jnp.sqrt(var) * ni
        return mean, var, z

    return jax.vmap(one)(x, drop_masks, noise)


if __name__ == "__main__":
    root = jax.random.PRNGKey(0)
    k_param, k_x, k_noise, k_drop = jax.random.split(root, 4)

    params = init_params(k_param)
    x = jax.random.normal(k_x, (N_INSTANCES, BATCH, INPUT_DIM), jnp.float32)
    noise = jax.random.normal(k_noise, (N_INSTANCES, BATCH, LATENT_DIM), jnp.float32)
    keep = jax.random.bernoulli(
        k_drop, 1.0 - DROPOUT_P,
        (N_INSTANCES, N_HIDDEN_LAYERS, BATCH, HIDDEN_DIM))
    drop_masks = keep.astype(jnp.float32) * (1.0 / (1.0 - DROPOUT_P))

    mean, var, latent_rep = vidr_encoder_forward(x, params, drop_masks, noise)
    jax.block_until_ready((mean, var, latent_rep))

    assert mean.shape == (N_INSTANCES, BATCH, LATENT_DIM)
    assert var.shape == (N_INSTANCES, BATCH, LATENT_DIM)
    assert latent_rep.shape == (N_INSTANCES, BATCH, LATENT_DIM)
    assert bool(jnp.all(jnp.isfinite(mean)))
    assert bool(jnp.all(var > 0.0))
    assert bool(jnp.all(jnp.isfinite(latent_rep)))

    # Numerical sanity check against a pure-JAX reference (same randoms).
    r_mean, r_var, r_z = vidr_reference(x, params, drop_masks, noise)
    assert bool(jnp.allclose(mean, r_mean, rtol=1e-2, atol=1e-2))
    assert bool(jnp.allclose(var, r_var, rtol=1e-2, atol=1e-2))
    assert bool(jnp.allclose(latent_rep, r_z, rtol=1e-2, atol=1e-2))

    print("KERNEL_OK")
</pallas_src>

<mosaic_0001>
module attributes {stable_mosaic.version = 11 : i64} {
  func.func @vidr_kernel(%arg0: i32, %arg1: memref<32x32xf32, #tpu.memory_space<vmem>>, %arg2: memref<32x32xf32, #tpu.memory_space<vmem>>, %arg3: memref<1x32xf32, #tpu.memory_space<vmem>>, %arg4: memref<1x32xf32, #tpu.memory_space<vmem>>, %arg5: memref<1x32xf32, #tpu.memory_space<vmem>>, %arg6: memref<32x32xf32, #tpu.memory_space<vmem>>, %arg7: memref<1x32xf32, #tpu.memory_space<vmem>>, %arg8: memref<1x32xf32, #tpu.memory_space<vmem>>, %arg9: memref<1x32xf32, #tpu.memory_space<vmem>>, %arg10: memref<32x32xf32, #tpu.memory_space<vmem>>, %arg11: memref<1x32xf32, #tpu.memory_space<vmem>>, %arg12: memref<4x32xf32, #tpu.memory_space<vmem>>, %arg13: memref<32x4xf32, #tpu.memory_space<vmem>>, %arg14: memref<3x32x32xf32, #tpu.memory_space<vmem>>, %arg15: memref<32x16xf32, #tpu.memory_space<vmem>>, %arg16: memref<32x48xf32, #tpu.memory_space<vmem>>) attributes {dimension_semantics = [#tpu.dimension_semantics<arbitrary>], iteration_bounds = array<i64: 1>, scalar_prefetch = 0 : i64, scratch_operands = 0 : i64, tpu.core_type = #tpu.core_type<tc>, window_params = [{pipeline_mode = #tpu.pipeline_mode<synchronous>, transform_indices = @transform_0, window_bounds = array<i64: 32, 32>}, {pipeline_mode = #tpu.pipeline_mode<synchronous>, transform_indices = @transform_1, window_bounds = array<i64: 32, 32>}, {pipeline_mode = #tpu.pipeline_mode<synchronous>, transform_indices = @transform_2, window_bounds = array<i64: 1, 32>}, {pipeline_mode = #tpu.pipeline_mode<synchronous>, transform_indices = @transform_3, window_bounds = array<i64: 1, 32>}, {pipeline_mode = #tpu.pipeline_mode<synchronous>, transform_indices = @transform_4, window_bounds = array<i64: 1, 32>}, {pipeline_mode = #tpu.pipeline_mode<synchronous>, transform_indices = @transform_5, window_bounds = array<i64: 32, 32>}, {pipeline_mode = #tpu.pipeline_mode<synchronous>, transform_indices = @transform_6, window_bounds = array<i64: 1, 32>}, {pipeline_mode = #tpu.pipeline_mode<synchronous>, transform_indices = @transform_7, window_bounds = array<i64: 1, 32>}, {pipeline_mode = #tpu.pipeline_mode<synchronous>, transform_indices = @transform_8, window_bounds = array<i64: 1, 32>}, {pipeline_mode = #tpu.pipeline_mode<synchronous>, transform_indices = @transform_9, window_bounds = array<i64: 32, 32>}, {pipeline_mode = #tpu.pipeline_mode<synchronous>, transform_indices = @transform_10, window_bounds = array<i64: 1, 32>}, {pipeline_mode = #tpu.pipeline_mode<synchronous>, transform_indices = @transform_11, window_bounds = array<i64: 4, 32>}, {pipeline_mode = #tpu.pipeline_mode<synchronous>, transform_indices = @transform_12, window_bounds = array<i64: 32, 4>}, {pipeline_mode = #tpu.pipeline_mode<synchronous>, transform_indices = @transform_13, window_bounds = array<i64: 3, 32, 32>}, {pipeline_mode = #tpu.pipeline_mode<synchronous>, transform_indices = @transform_14, window_bounds = array<i64: 32, 16>}, {pipeline_mode = #tpu.pipeline_mode<synchronous>, transform_indices = @transform_15, window_bounds = array<i64: 32, 48>}]} {
    %c0 = arith.constant 0 : index
    %c0_0 = arith.constant 0 : index
    %0 = vector.load %arg1[%c0, %c0_0] : memref<32x32xf32, #tpu.memory_space<vmem>>, vector<32x32xf32>
    %c0_1 = arith.constant 0 : index
    %c0_2 = arith.constant 0 : index
    %1 = vector.load %arg12[%c0_1, %c0_2] : memref<4x32xf32, #tpu.memory_space<vmem>>, vector<4x32xf32>
    %c0_3 = arith.constant 0 : index
    %c0_4 = arith.constant 0 : index
    %2 = vector.load %arg13[%c0_3, %c0_4] : memref<32x4xf32, #tpu.memory_space<vmem>>, vector<32x4xf32>
    %c0_5 = arith.constant 0 : index
    %c0_6 = arith.constant 0 : index
    %3 = vector.load %arg2[%c0_5, %c0_6] : memref<32x32xf32, #tpu.memory_space<vmem>>, vector<32x32xf32>
    %c0_7 = arith.constant 0 : index
    %c0_8 = arith.constant 0 : index
    %4 = vector.load %arg3[%c0_7, %c0_8] : memref<1x32xf32, #tpu.memory_space<vmem>>, vector<1x32xf32>
    %c0_9 = arith.constant 0 : index
    %c0_10 = arith.constant 0 : index
    %5 = vector.load %arg4[%c0_9, %c0_10] : memref<1x32xf32, #tpu.memory_space<vmem>>, vector<1x32xf32>
    %c0_11 = arith.constant 0 : index
    %c0_12 = arith.constant 0 : index
    %6 = vector.load %arg5[%c0_11, %c0_12] : memref<1x32xf32, #tpu.memory_space<vmem>>, vector<1x32xf32>
    %c0_13 = arith.constant 0 : index
    %c0_14 = arith.constant 0 : index
    %c0_15 = arith.constant 0 : index
    %7 = vector.load %arg14[%c0_13, %c0_14, %c0_15] : memref<3x32x32xf32, #tpu.memory_space<vmem>>, vector<1x32x32xf32>
    %8 = vector.shape_cast %7 : vector<1x32x32xf32> to vector<32x32xf32>
    %cst = arith.constant dense<0.000000e+00> : vector<32x32xf32>
    %9 = tpu.matmul %0, %3, %cst {dimension_numbers = #tpu.dot_dimension_numbers<[1], [0], [0], [1], [0, 0, 1, 1], [], []>} : vector<32x32xf32>, vector<32x32xf32>, vector<32x32xf32> -> vector<32x32xf32>
    %10 = vector.broadcast %4 : vector<1x32xf32> to vector<32x32xf32>
    %11 = arith.addf %9, %10 : vector<32x32xf32>
    %12 = arith.mulf %11, %11 : vector<32x32xf32>
    %13 = tpu.concatenate %11, %12 in 1 : vector<32x32xf32>, vector<32x32xf32> -> vector<32x64xf32>
    %cst_16 = arith.constant dense<0.000000e+00> : vector<4x64xf32>
    %14 = tpu.matmul %1, %13, %cst_16 {dimension_numbers = #tpu.dot_dimension_numbers<[1], [0], [0], [1], [0, 0, 1, 1], [], []>} : vector<4x32xf32>, vector<32x64xf32>, vector<4x64xf32> -> vector<4x64xf32>
    %15 = vector.extract_strided_slice %14 {offsets = [0, 0], sizes = [4, 32], strides = [1, 1]} : vector<4x64xf32> to vector<4x32xf32>
    %16 = vector.extract_strided_slice %14 {offsets = [0, 32], sizes = [4, 32], strides = [1, 1]} : vector<4x64xf32> to vector<4x32xf32>
    %17 = arith.mulf %15, %15 : vector<4x32xf32>
    %18 = arith.subf %16, %17 : vector<4x32xf32>
    %cst_17 = arith.constant 0.000000e+00 : f32
    %19 = vector.broadcast %cst_17 : f32 to vector<4x32xf32>
    %20 = arith.maximumf %18, %19 : vector<4x32xf32>
    %cst_18 = arith.constant 1.000000e-03 : f32
    %21 = vector.broadcast %cst_18 : f32 to vector<4x32xf32>
    %22 = arith.addf %20, %21 : vector<4x32xf32>
    %23 = math.rsqrt %22 : vector<4x32xf32>
    %24 = vector.broadcast %5 : vector<1x32xf32> to vector<4x32xf32>
    %25 = arith.mulf %23, %24 : vector<4x32xf32>
    %26 = arith.mulf %15, %25 : vector<4x32xf32>
    %27 = vector.broadcast %6 : vector<1x32xf32> to vector<4x32xf32>
    %28 = arith.subf %27, %26 : vector<4x32xf32>
    %29 = tpu.concatenate %25, %28 in 1 : vector<4x32xf32>, vector<4x32xf32> -> vector<4x64xf32>
    %cst_19 = arith.constant dense<0.000000e+00> : vector<32x64xf32>
    %30 = tpu.matmul %2, %29, %cst_19 {dimension_numbers = #tpu.dot_dimension_numbers<[1], [0], [0], [1], [0, 0, 1, 1], [], []>} : vector<32x4xf32>, vector<4x64xf32>, vector<32x64xf32> -> vector<32x64xf32>
    %31 = vector.extract_strided_slice %30 {offsets = [0, 0], sizes = [32, 32], strides = [1, 1]} : vector<32x64xf32> to vector<32x32xf32>
    %32 = arith.mulf %11, %31 : vector<32x32xf32>
    %33 = vector.extract_strided_slice %30 {offsets = [0, 32], sizes = [32, 32], strides = [1, 1]} : vector<32x64xf32> to vector<32x32xf32>
    %34 = arith.addf %32, %33 : vector<32x32xf32>
    %cst_20 = arith.constant 0.00999999977 : f32
    %35 = vector.broadcast %cst_20 : f32 to vector<32x32xf32>
    %36 = arith.mulf %35, %34 : vector<32x32xf32>
    %37 = arith.maximumf %34, %36 : vector<32x32xf32>
    %38 = arith.mulf %37, %8 : vector<32x32xf32>
    %c0_21 = arith.constant 0 : index
    %c0_22 = arith.constant 0 : index
    %39 = vector.load %arg6[%c0_21, %c0_22] : memref<32x32xf32, #tpu.memory_space<vmem>>, vector<32x32xf32>
    %c0_23 = arith.constant 0 : index
    %c0_24 = arith.constant 0 : index
    %40 = vector.load %arg7[%c0_23, %c0_24] : memref<1x32xf32, #tpu.memory_space<vmem>>, vector<1x32xf32>
    %c0_25 = arith.constant 0 : index
    %c0_26 = arith.constant 0 : index
    %41 = vector.load %arg8[%c0_25, %c0_26] : memref<1x32xf32, #tpu.memory_space<vmem>>, vector<1x32xf32>
    %c0_27 = arith.constant 0 : index
    %c0_28 = arith.constant 0 : index
    %42 = vector.load %arg9[%c0_27, %c0_28] : memref<1x32xf32, #tpu.memory_space<vmem>>, vector<1x32xf32>
    %c1 = arith.constant 1 : index
    %c0_29 = arith.constant 0 : index
    %c0_30 = arith.constant 0 : index
    %43 = vector.load %arg14[%c1, %c0_29, %c0_30] : memref<3x32x32xf32, #tpu.memory_space<vmem>>, vector<1x32x32xf32>
    %44 = vector.shape_cast %43 : vector<1x32x32xf32> to vector<32x32xf32>
    %cst_31 = arith.constant dense<0.000000e+00> : vector<32x32xf32>
    %45 = tpu.matmul %38, %39, %cst_31 {dimension_numbers = #tpu.dot_dimension_numbers<[1], [0], [0], [1], [0, 0, 1, 1], [], []>} : vector<32x32xf32>, vector<32x32xf32>, vector<32x32xf32> -> vector<32x32xf32>
    %46 = vector.broadcast %40 : vector<1x32xf32> to vector<32x32xf32>
    %47 = arith.addf %45, %46 : vector<32x32xf32>
    %48 = arith.mulf %47, %47 : vector<32x32xf32>
    %49 = tpu.concatenate %47, %48 in 1 : vector<32x32xf32>, vector<32x32xf32> -> vector<32x64xf32>
    %cst_32 = arith.constant dense<0.000000e+00> : vector<4x64xf32>
    %50 = tpu.matmul %1, %49, %cst_32 {dimension_numbers = #tpu.dot_dimension_numbers<[1], [0], [0], [1], [0, 0, 1, 1], [], []>} : vector<4x32xf32>, vector<32x64xf32>, vector<4x64xf32> -> vector<4x64xf32>
    %51 = vector.extract_strided_slice %50 {offsets = [0, 0], sizes = [4, 32], strides = [1, 1]} : vector<4x64xf32> to vector<4x32xf32>
    %52 = vector.extract_strided_slice %50 {offsets = [0, 32], sizes = [4, 32], strides = [1, 1]} : vector<4x64xf32> to vector<4x32xf32>
    %53 = arith.mulf %51, %51 : vector<4x32xf32>
    %54 = arith.subf %52, %53 : vector<4x32xf32>
    %cst_33 = arith.constant 0.000000e+00 : f32
    %55 = vector.broadcast %cst_33 : f32 to vector<4x32xf32>
    %56 = arith.maximumf %54, %55 : vector<4x32xf32>
    %cst_34 = arith.constant 1.000000e-03 : f32
    %57 = vector.broadcast %cst_34 : f32 to vector<4x32xf32>
    %58 = arith.addf %56, %57 : vector<4x32xf32>
    %59 = math.rsqrt %58 : vector<4x32xf32>
    %60 = vector.broadcast %41 : vector<1x32xf32> to vector<4x32xf32>
    %61 = arith.mulf %59, %60 : vector<4x32xf32>
    %62 = arith.mulf %51, %61 : vector<4x32xf32>
    %63 = vector.broadcast %42 : vector<1x32xf32> to vector<4x32xf32>
    %64 = arith.subf %63, %62 : vector<4x32xf32>
    %65 = tpu.concatenate %61, %64 in 1 : vector<4x32xf32>, vector<4x32xf32> -> vector<4x64xf32>
    %cst_35 = arith.constant dense<0.000000e+00> : vector<32x64xf32>
    %66 = tpu.matmul %2, %65, %cst_35 {dimension_numbers = #tpu.dot_dimension_numbers<[1], [0], [0], [1], [0, 0, 1, 1], [], []>} : vector<32x4xf32>, vector<4x64xf32>, vector<32x64xf32> -> vector<32x64xf32>
    %67 = vector.extract_strided_slice %66 {offsets = [0, 0], sizes = [32, 32], strides = [1, 1]} : vector<32x64xf32> to vector<32x32xf32>
    %68 = arith.mulf %47, %67 : vector<32x32xf32>
    %69 = vector.extract_strided_slice %66 {offsets = [0, 32], sizes = [32, 32], strides = [1, 1]} : vector<32x64xf32> to vector<32x32xf32>
    %70 = arith.addf %68, %69 : vector<32x32xf32>
    %cst_36 = arith.constant 0.00999999977 : f32
    %71 = vector.broadcast %cst_36 : f32 to vector<32x32xf32>
    %72 = arith.mulf %71, %70 : vector<32x32xf32>
    %73 = arith.maximumf %70, %72 : vector<32x32xf32>
    %74 = arith.mulf %73, %44 : vector<32x32xf32>
    %c0_37 = arith.constant 0 : index
    %c0_38 = arith.constant 0 : index
    %75 = vector.load %arg6[%c0_37, %c0_38] : memref<32x32xf32, #tpu.memory_space<vmem>>, vector<32x32xf32>
    %c0_39 = arith.constant 0 : index
    %c0_40 = arith.constant 0 : index
    %76 = vector.load %arg7[%c0_39, %c0_40] : memref<1x32xf32, #tpu.memory_space<vmem>>, vector<1x32xf32>
    %c0_41 = arith.constant 0 : index
    %c0_42 = arith.constant 0 : index
    %77 = vector.load %arg8[%c0_41, %c0_42] : memref<1x32xf32, #tpu.memory_space<vmem>>, vector<1x32xf32>
    %c0_43 = arith.constant 0 : index
    %c0_44 = arith.constant 0 : index
    %78 = vector.load %arg9[%c0_43, %c0_44] : memref<1x32xf32, #tpu.memory_space<vmem>>, vector<1x32xf32>
    %c2 = arith.constant 2 : index
    %c0_45 = arith.constant 0 : index
    %c0_46 = arith.constant 0 : index
    %79 = vector.load %arg14[%c2, %c0_45, %c0_46] : memref<3x32x32xf32, #tpu.memory_space<vmem>>, vector<1x32x32xf32>
    %80 = vector.shape_cast %79 : vector<1x32x32xf32> to vector<32x32xf32>
    %cst_47 = arith.constant dense<0.000000e+00> : vector<32x32xf32>
    %81 = tpu.matmul %74, %75, %cst_47 {dimension_numbers = #tpu.dot_dimension_numbers<[1], [0], [0], [1], [0, 0, 1, 1], [], []>} : vector<32x32xf32>, vector<32x32xf32>, vector<32x32xf32> -> vector<32x32xf32>
    %82 = vector.broadcast %76 : vector<1x32xf32> to vector<32x32xf32>
    %83 = arith.addf %81, %82 : vector<32x32xf32>
    %84 = arith.mulf %83, %83 : vector<32x32xf32>
    %85 = tpu.concatenate %83, %84 in 1 : vector<32x32xf32>, vector<32x32xf32> -> vector<32x64xf32>
    %cst_48 = arith.constant dense<0.000000e+00> : vector<4x64xf32>
    %86 = tpu.matmul %1, %85, %cst_48 {dimension_numbers = #tpu.dot_dimension_numbers<[1], [0], [0], [1], [0, 0, 1, 1], [], []>} : vector<4x32xf32>, vector<32x64xf32>, vector<4x64xf32> -> vector<4x64xf32>
    %87 = vector.extract_strided_slice %86 {offsets = [0, 0], sizes = [4, 32], strides = [1, 1]} : vector<4x64xf32> to vector<4x32xf32>
    %88 = vector.extract_strided_slice %86 {offsets = [0, 32], sizes = [4, 32], strides = [1, 1]} : vector<4x64xf32> to vector<4x32xf32>
    %89 = arith.mulf %87, %87 : vector<4x32xf32>
    %90 = arith.subf %88, %89 : vector<4x32xf32>
    %cst_49 = arith.constant 0.000000e+00 : f32
    %91 = vector.broadcast %cst_49 : f32 to vector<4x32xf32>
    %92 = arith.maximumf %90, %91 : vector<4x32xf32>
    %cst_50 = arith.constant 1.000000e-03 : f32
    %93 = vector.broadcast %cst_50 : f32 to vector<4x32xf32>
    %94 = arith.addf %92, %93 : vector<4x32xf32>
    %95 = math.rsqrt %94 : vector<4x32xf32>
    %96 = vector.broadcast %77 : vector<1x32xf32> to vector<4x32xf32>
    %97 = arith.mulf %95, %96 : vector<4x32xf32>
    %98 = arith.mulf %87, %97 : vector<4x32xf32>
    %99 = vector.broadcast %78 : vector<1x32xf32> to vector<4x32xf32>
    %100 = arith.subf %99, %98 : vector<4x32xf32>
    %101 = tpu.concatenate %97, %100 in 1 : vector<4x32xf32>, vector<4x32xf32> -> vector<4x64xf32>
    %cst_51 = arith.constant dense<0.000000e+00> : vector<32x64xf32>
    %102 = tpu.matmul %2, %101, %cst_51 {dimension_numbers = #tpu.dot_dimension_numbers<[1], [0], [0], [1], [0, 0, 1, 1], [], []>} : vector<32x4xf32>, vector<4x64xf32>, vector<32x64xf32> -> vector<32x64xf32>
    %103 = vector.extract_strided_slice %102 {offsets = [0, 0], sizes = [32, 32], strides = [1, 1]} : vector<32x64xf32> to vector<32x32xf32>
    %104 = arith.mulf %83, %103 : vector<32x32xf32>
    %105 = vector.extract_strided_slice %102 {offsets = [0, 32], sizes = [32, 32], strides = [1, 1]} : vector<32x64xf32> to vector<32x32xf32>
    %106 = arith.addf %104, %105 : vector<32x32xf32>
    %cst_52 = arith.constant 0.00999999977 : f32
    %107 = vector.broadcast %cst_52 : f32 to vector<32x32xf32>
    %108 = arith.mulf %107, %106 : vector<32x32xf32>
    %109 = arith.maximumf %106, %108 : vector<32x32xf32>
    %110 = arith.mulf %109, %80 : vector<32x32xf32>
    %c0_53 = arith.constant 0 : index
    %c0_54 = arith.constant 0 : index
    %111 = vector.load %arg10[%c0_53, %c0_54] : memref<32x32xf32, #tpu.memory_space<vmem>>, vector<32x32xf32>
    %cst_55 = arith.constant dense<0.000000e+00> : vector<32x32xf32>
    %112 = tpu.matmul %110, %111, %cst_55 {dimension_numbers = #tpu.dot_dimension_numbers<[1], [0], [0], [1], [0, 0, 1, 1], [], []>} : vector<32x32xf32>, vector<32x32xf32>, vector<32x32xf32> -> vector<32x32xf32>
    %c0_56 = arith.constant 0 : index
    %c0_57 = arith.constant 0 : index
    %113 = vector.load %arg11[%c0_56, %c0_57] : memref<1x32xf32, #tpu.memory_space<vmem>>, vector<1x32xf32>
    %114 = vector.broadcast %113 : vector<1x32xf32> to vector<32x32xf32>
    %115 = arith.addf %112, %114 : vector<32x32xf32>
    %116 = vector.extract_strided_slice %115 {offsets = [0, 0], sizes = [32, 16], strides = [1, 1]} : vector<32x32xf32> to vector<32x16xf32>
    %117 = vector.extract_strided_slice %115 {offsets = [0, 16], sizes = [32, 16], strides = [1, 1]} : vector<32x32xf32> to vector<32x16xf32>
    %118 = math.exp %117 : vector<32x16xf32>
    %cst_58 = arith.constant 9.99999974E-5 : f32
    %119 = vector.broadcast %cst_58 : f32 to vector<32x16xf32>
    %120 = arith.addf %118, %119 : vector<32x16xf32>
    %121 = math.sqrt %120 : vector<32x16xf32>
    %c0_59 = arith.constant 0 : index
    %c0_60 = arith.constant 0 : index
    %122 = vector.load %arg15[%c0_59, %c0_60] : memref<32x16xf32, #tpu.memory_space<vmem>>, vector<32x16xf32>
    %123 = arith.mulf %121, %122 : vector<32x16xf32>
    %124 = arith.addf %116, %123 : vector<32x16xf32>
    %125 = tpu.concatenate %116, %120, %124 in 1 : vector<32x16xf32>, vector<32x16xf32>, vector<32x16xf32> -> vector<32x48xf32>
    %c0_61 = arith.constant 0 : index
    %c0_62 = arith.constant 0 : index
    %126 = vector.load %arg16[%c0_61, %c0_62] : memref<32x48xf32, #tpu.memory_space<vmem>>, vector<32x48xf32>
    tpu.vector_store %arg16[%c0_61, %c0_62], %125 {strides = array<i32>} : memref<32x48xf32, #tpu.memory_space<vmem>>, vector<32x48xf32>,
    return
  }
  func.func @transform_0(%arg0: i32) -> (i32, i32) {
    %c0_i32 = arith.constant 0 : i32
    %c0_i32_0 = arith.constant 0 : i32
    %c0_i32_1 = arith.constant 0 : i32
    return %c0_i32, %c0_i32_0 : i32, i32
  }
  func.func @transform_1(%arg0: i32) -> (i32, i32) {
    %c0_i32 = arith.constant 0 : i32
    %c0_i32_0 = arith.constant 0 : i32
    %c0_i32_1 = arith.constant 0 : i32
    return %c0_i32, %c0_i32_0 : i32, i32
  }
  func.func @transform_2(%arg0: i32) -> (i32, i32) {
    %c0_i32 = arith.constant 0 : i32
    %c0_i32_0 = arith.constant 0 : i32
    %c0_i32_1 = arith.constant 0 : i32
    return %c0_i32, %c0_i32_0 : i32, i32
  }
  func.func @transform_3(%arg0: i32) -> (i32, i32) {
    %c0_i32 = arith.constant 0 : i32
    %c0_i32_0 = arith.constant 0 : i32
    %c0_i32_1 = arith.constant 0 : i32
    return %c0_i32, %c0_i32_0 : i32, i32
  }
  func.func @transform_4(%arg0: i32) -> (i32, i32) {
    %c0_i32 = arith.constant 0 : i32
    %c0_i32_0 = arith.constant 0 : i32
    %c0_i32_1 = arith.constant 0 : i32
    return %c0_i32, %c0_i32_0 : i32, i32
  }
  func.func @transform_5(%arg0: i32) -> (i32, i32) {
    %c0_i32 = arith.constant 0 : i32
    %c0_i32_0 = arith.constant 0 : i32
    %c0_i32_1 = arith.constant 0 : i32
    return %c0_i32, %c0_i32_0 : i32, i32
  }
  func.func @transform_6(%arg0: i32) -> (i32, i32) {
    %c0_i32 = arith.constant 0 : i32
    %c0_i32_0 = arith.constant 0 : i32
    %c0_i32_1 = arith.constant 0 : i32
    return %c0_i32, %c0_i32_0 : i32, i32
  }
  func.func @transform_7(%arg0: i32) -> (i32, i32) {
    %c0_i32 = arith.constant 0 : i32
    %c0_i32_0 = arith.constant 0 : i32
    %c0_i32_1 = arith.constant 0 : i32
    return %c0_i32, %c0_i32_0 : i32, i32
  }
  func.func @transform_8(%arg0: i32) -> (i32, i32) {
    %c0_i32 = arith.constant 0 : i32
    %c0_i32_0 = arith.constant 0 : i32
    %c0_i32_1 = arith.constant 0 : i32
    return %c0_i32, %c0_i32_0 : i32, i32
  }
  func.func @transform_9(%arg0: i32) -> (i32, i32) {
    %c0_i32 = arith.constant 0 : i32
    %c0_i32_0 = arith.constant 0 : i32
    %c0_i32_1 = arith.constant 0 : i32
    return %c0_i32, %c0_i32_0 : i32, i32
  }
  func.func @transform_10(%arg0: i32) -> (i32, i32) {
    %c0_i32 = arith.constant 0 : i32
    %c0_i32_0 = arith.constant 0 : i32
    %c0_i32_1 = arith.constant 0 : i32
    return %c0_i32, %c0_i32_0 : i32, i32
  }
  func.func @transform_11(%arg0: i32) -> (i32, i32) {
    %c0_i32 = arith.constant 0 : i32
    %c0_i32_0 = arith.constant 0 : i32
    %c0_i32_1 = arith.constant 0 : i32
    return %c0_i32, %c0_i32_0 : i32, i32
  }
  func.func @transform_12(%arg0: i32) -> (i32, i32) {
    %c0_i32 = arith.constant 0 : i32
    %c0_i32_0 = arith.constant 0 : i32
    %c0_i32_1 = arith.constant 0 : i32
    return %c0_i32, %c0_i32_0 : i32, i32
  }
  func.func @transform_13(%arg0: i32) -> (i32, i32, i32) {
    %c0_i32 = arith.constant 0 : i32
    %c0_i32_0 = arith.constant 0 : i32
    %c0_i32_1 = arith.constant 0 : i32
    %c0_i32_2 = arith.constant 0 : i32
    return %c0_i32, %c0_i32_0, %c0_i32_1 : i32, i32, i32
  }
  func.func @transform_14(%arg0: i32) -> (i32, i32) {
    %c0_i32 = arith.constant 0 : i32
    %c0_i32_0 = arith.constant 0 : i32
    %c0_i32_1 = arith.constant 0 : i32
    return %c0_i32, %c0_i32_0 : i32, i32
  }
  func.func @transform_15(%arg0: i32) -> (i32, i32) {
    %c0_i32 = arith.constant 0 : i32
    %c0_i32_0 = arith.constant 0 : i32
    %c0_i32_1 = arith.constant 0 : i32
    return %c0_i32, %c0_i32_0 : i32, i32
  }
}

</mosaic_0001>

<llo_original>
// kernel: eq.8
$region0: #{eq.8}
  %s0 = inlined_call_operand.vmem [shape: s32[4,8], index: 0, kind: input, shape index: {}]
  %s1 = inlined_call_operand.vmem [shape: s32[32], index: 1, kind: output, shape index: {}]
  $region1: #{eq.8} parent=0
    #allocation0 [shape = 'u8[4096]{0}', space=vmem, size = 0x1000, scoped, tag = 'scoped mem for output reshape']
    #allocation1 [shape = 'u8[4096]{0}', space=vmem, size = 0x1000, scoped, tag = 'scoped mem for input reshape']
    %s3 = ssub.s32 16, 1
    %v4 = vld [vmem:[%s0] sm:%s3]
    %5 = vst [vmem:[#allocation1] sm:%s3] %v4
    %v6 = vld [vmem:[#allocation1] sm:$0x1]
    %vm7 = vcmask 64512
    %8 = vst.msk [vmem:[#allocation0] sm:$0x1] %vm7, %v6
    %s9 = scalar_lea.vmem [#allocation1], 3
    %v10 = vld [vmem:[%s9] sm:$0x1]
    %11 = vrot.lane.b32.xlu0 %v10, 24
    %v12 = vpop.permute.xlu0 %11
    %vm13 = vcmask 261312
    %14 = vst.msk [vmem:[#allocation0] sm:$0x1] %vm13, %v12
    %s15 = scalar_lea.vmem [#allocation1], 2
    %v16 = vld [vmem:[%s15] sm:$0x1]
    %17 = vrot.lane.b32.xlu0 %v16, 16
    %v18 = vpop.permute.xlu0 %17
    %vm19 = vcmask 195712
    %20 = vst.msk [vmem:[#allocation0] sm:$0x1] %vm19, %v18
    %s21 = scalar_lea.vmem [#allocation1], 1
    %v22 = vld [vmem:[%s21] sm:$0x1]
    %23 = vrot.lane.b32.xlu0 %v22, 8
    %v24 = vpop.permute.xlu0 %23
    %vm25 = vcmask 130112
    %26 = vst.msk [vmem:[#allocation0] sm:$0x1] %vm25, %v24
    %s28 = ssub.s32 2, 1
    %v29 = vld [vmem:[#allocation0] sm:%s28]
    %s31 = ssub.s32 2, 1
    %32 = vst [vmem:[%s1] sm:%s31] %v29

// kernel: vidr_encoder_forward.1
$region0: #{vidr_encoder_forward.1}
  #allocation0 [shape = 'u32[]', space=smem, size = 0x4, offset = 0x4, fixed_abs, tag = 'smem constant byte address 0x4 - core index']
  #allocation1 [shape = 'u32[72,128]{1,0:T(1,128)}', space=vmem, size = 0x9000, scoped, tag = 'internal scratch']
  %s0 = inlined_call_operand.vmem [shape: f32[32,32], index: 0, kind: input, shape index: {}]
  %s1 = inlined_call_operand.vmem [shape: f32[32,32], index: 1, kind: input, shape index: {}]
  %s2 = inlined_call_operand.vmem [shape: f32[1,32], index: 2, kind: input, shape index: {}]
  %s3 = inlined_call_operand.vmem [shape: f32[1,32], index: 3, kind: input, shape index: {}]
  %s4 = inlined_call_operand.vmem [shape: f32[1,32], index: 4, kind: input, shape index: {}]
  %s5 = inlined_call_operand.vmem [shape: f32[32,32], index: 5, kind: input, shape index: {}]
  %s6 = inlined_call_operand.vmem [shape: f32[1,32], index: 6, kind: input, shape index: {}]
  %s7 = inlined_call_operand.vmem [shape: f32[1,32], index: 7, kind: input, shape index: {}]
  %s8 = inlined_call_operand.vmem [shape: f32[1,32], index: 8, kind: input, shape index: {}]
  %s9 = inlined_call_operand.vmem [shape: f32[32,32], index: 9, kind: input, shape index: {}]
  %s10 = inlined_call_operand.vmem [shape: f32[1,32], index: 10, kind: input, shape index: {}]
  %s11 = inlined_call_operand.vmem [shape: f32[4,32], index: 11, kind: input, shape index: {}]
  %s12 = inlined_call_operand.vmem [shape: f32[32,4], index: 12, kind: input, shape index: {}]
  %s13 = inlined_call_operand.vmem [shape: f32[3,32,32], index: 13, kind: input, shape index: {}]
  %s14 = inlined_call_operand.vmem [shape: f32[32,16], index: 14, kind: input, shape index: {}]
  %s15 = inlined_call_operand.vmem [shape: f32[32,48], index: 15, kind: output, shape index: {}]
  %s16 = sld [smem:[#allocation0]]
  $region70: #{vidr_encoder_forward.1} parent=0
    _
  %s18 = ssub.s32 1, %s16
  %s19 = scalar_select 0, %s18, %s16
  // Predicated region
  $region2: #{vidr_encoder_forward.1} parent=0 // pred_check
    _
  $region3: #{vidr_encoder_forward.1} parent=0 // pred_check_branch
    %21 = sbr.rel (0) target = $region5
  $region4: #{vidr_encoder_forward.1} parent=0 // pred_region
    _
  $region5: #{vidr_encoder_forward.1} parent=0 // pred_fallthru
    _
  // Predicated region
  $region6: #{vidr_encoder_forward.1} parent=0 // pred_check
    _
  $region7: #{vidr_encoder_forward.1} parent=0 // pred_check_branch
    %23 = sbr.rel (0) target = $region9
  $region8: #{vidr_encoder_forward.1} parent=0 // pred_region
    _
  $region9: #{vidr_encoder_forward.1} parent=0 // pred_fallthru
    _
  // Predicated region
  $region10: #{vidr_encoder_forward.1} parent=0 // pred_check
    _
  $region11: #{vidr_encoder_forward.1} parent=0 // pred_check_branch
    %25 = sbr.rel (0) target = $region13
  $region12: #{vidr_encoder_forward.1} parent=0 // pred_region
    _
  $region13: #{vidr_encoder_forward.1} parent=0 // pred_fallthru
    _
  // Predicated region
  $region14: #{vidr_encoder_forward.1} parent=0 // pred_check
    _
  $region15: #{vidr_encoder_forward.1} parent=0 // pred_check_branch
    %27 = sbr.rel (0) target = $region17
  $region16: #{vidr_encoder_forward.1} parent=0 // pred_region
    _
  $region17: #{vidr_encoder_forward.1} parent=0 // pred_fallthru
    _
  // Predicated region
  $region18: #{vidr_encoder_forward.1} parent=0 // pred_check
    _
  $region19: #{vidr_encoder_forward.1} parent=0 // pred_check_branch
    %29 = sbr.rel (0) target = $region21
  $region20: #{vidr_encoder_forward.1} parent=0 // pred_region
    _
  $region21: #{vidr_encoder_forward.1} parent=0 // pred_fallthru
    _
  // Predicated region
  $region22: #{vidr_encoder_forward.1} parent=0 // pred_check
    _
  $region23: #{vidr_encoder_forward.1} parent=0 // pred_check_branch
    %31 = sbr.rel (0) target = $region25
  $region24: #{vidr_encoder_forward.1} parent=0 // pred_region
    _
  $region25: #{vidr_encoder_forward.1} parent=0 // pred_fallthru
    _
  // Predicated region
  $region26: #{vidr_encoder_forward.1} parent=0 // pred_check
    _
  $region27: #{vidr_encoder_forward.1} parent=0 // pred_check_branch
    %33 = sbr.rel (0) target = $region29
  $region28: #{vidr_encoder_forward.1} parent=0 // pred_region
    _
  $region29: #{vidr_encoder_forward.1} parent=0 // pred_fallthru
    _
  // Predicated region
  $region30: #{vidr_encoder_forward.1} parent=0 // pred_check
    _
  $region31: #{vidr_encoder_forward.1} parent=0 // pred_check_branch
    %35 = sbr.rel (0) target = $region33
  $region32: #{vidr_encoder_forward.1} parent=0 // pred_region
    _
  $region33: #{vidr_encoder_forward.1} parent=0 // pred_fallthru
    _
  // Predicated region
  $region34: #{vidr_encoder_forward.1} parent=0 // pred_check
    _
  $region35: #{vidr_encoder_forward.1} parent=0 // pred_check_branch
    %37 = sbr.rel (0) target = $region37
  $region36: #{vidr_encoder_forward.1} parent=0 // pred_region
    _
  $region37: #{vidr_encoder_forward.1} parent=0 // pred_fallthru
    _
  // Predicated region
  $region38: #{vidr_encoder_forward.1} parent=0 // pred_check
    _
  $region39: #{vidr_encoder_forward.1} parent=0 // pred_check_branch
    %39 = sbr.rel (0) target = $region41
  $region40: #{vidr_encoder_forward.1} parent=0 // pred_region
    _
  $region41: #{vidr_encoder_forward.1} parent=0 // pred_fallthru
    _
  // Predicated region
  $region42: #{vidr_encoder_forward.1} parent=0 // pred_check
    _
  $region43: #{vidr_encoder_forward.1} parent=0 // pred_check_branch
    %41 = sbr.rel (0) target = $region45
  $region44: #{vidr_encoder_forward.1} parent=0 // pred_region
    _
  $region45: #{vidr_encoder_forward.1} parent=0 // pred_fallthru
    _
  // Predicated region
  $region46: #{vidr_encoder_forward.1} parent=0 // pred_check
    _
  $region47: #{vidr_encoder_forward.1} parent=0 // pred_check_branch
    %43 = sbr.rel (0) target = $region49
  $region48: #{vidr_encoder_forward.1} parent=0 // pred_region
    _
  $region49: #{vidr_encoder_forward.1} parent=0 // pred_fallthru
    _
  // Predicated region
  $region50: #{vidr_encoder_forward.1} parent=0 // pred_check
    _
  $region51: #{vidr_encoder_forward.1} parent=0 // pred_check_branch
    %45 = sbr.rel (0) target = $region53
  $region52: #{vidr_encoder_forward.1} parent=0 // pred_region
    _
  $region53: #{vidr_encoder_forward.1} parent=0 // pred_fallthru
    _
  // Predicated region
  $region54: #{vidr_encoder_forward.1} parent=0 // pred_check
    _
  $region55: #{vidr_encoder_forward.1} parent=0 // pred_check_branch
    %47 = sbr.rel (0) target = $region57
  $region56: #{vidr_encoder_forward.1} parent=0 // pred_region
    _
  $region57: #{vidr_encoder_forward.1} parent=0 // pred_fallthru
    _
  // Predicated region
  $region58: #{vidr_encoder_forward.1} parent=0 // pred_check
    _
  $region59: #{vidr_encoder_forward.1} parent=0 // pred_check_branch
    %49 = sbr.rel (0) target = $region61
  $region60: #{vidr_encoder_forward.1} parent=0 // pred_region
    _
  $region61: #{vidr_encoder_forward.1} parent=0 // pred_fallthru
    _
  %v50 = vld [vmem:[%s0] sm:$0xff]
  %v51 = vld [vmem:[%s0 + $0x8] sm:$0xff]
  %v52 = vld [vmem:[%s0 + $0x10] sm:$0xff]
  %v53 = vld [vmem:[%s0 + $0x18] sm:$0xff]
  %v54 = vld [vmem:[%s11] sm:$0xf]
  %v55 = vld [vmem:[%s12] sm:$0xff]
  %v56 = vld [vmem:[%s12 + $0x8] sm:$0xff]
  %v57 = vld [vmem:[%s12 + $0x10] sm:$0xff]
  %v58 = vld [vmem:[%s12 + $0x18] sm:$0xff]
  %v59 = vld [vmem:[%s1] sm:$0xff]
  %v60 = vld [vmem:[%s1 + $0x8] sm:$0xff]
  %v61 = vld [vmem:[%s1 + $0x10] sm:$0xff]
  %v62 = vld [vmem:[%s1 + $0x18] sm:$0xff]
  %v63 = vld [vmem:[%s2] sm:$0x1]
  %v64 = vld [vmem:[%s3] sm:$0x1]
  %v65 = vld [vmem:[%s4] sm:$0x1]
  %v66 = vld [vmem:[%s13] sm:$0xff]
  %v67 = vld [vmem:[%s13 + $0x8] sm:$0xff]
  %v68 = vld [vmem:[%s13 + $0x10] sm:$0xff]
  %v69 = vld [vmem:[%s13 + $0x18] sm:$0xff]
  %v71 = vperm.slane %v63, 0
  %vm73 = vcmask 261120
  %v75 = vsel %vm73, %v50, 0
  %v78 = vsel %vm73, %v51, 0
  %v81 = vsel %vm73, %v52, 0
  %v84 = vsel %vm73, %v53, 0
  %86 = vmatpush.msra.mxu0 0.0
  %87 = vmatpush.msra.mxu0 0.0
  %88 = vmatpush.msra.mxu0 0.0
  %89 = vmatpush.msra.mxu0 0.0
  %90 = vmatpush.msra.mxu0 0.0
  %91 = vmatpush.msra.mxu0 0.0
  %92 = vmatpush.msra.mxu0 0.0
  %93 = vmatpush.msra.mxu0 0.0
  %94 = vmatpush.msra.mxu0 0.0
  %95 = vmatpush.msra.mxu0 0.0
  %96 = vmatpush.msra.mxu0 0.0
  %97 = vmatpush.msra.mxu0 0.0
  %98 = vmatpush.msra.mxu0 %v62
  %99 = vmatpush.msra.mxu0 %v61
  %100 = vmatpush.msra.mxu0 %v60
  %101 = vmatpush.msra.mxu0 %v59
  %102 = vmatmul.f32.gmra.mxu0 %v75
  %v103 = vpop.f32.mrf.mxu0
  %v104 = vadd.f32 %v71, %v103
  %105 = vmatmul.f32.gmra.mxu0 %v78
  %v106 = vpop.f32.mrf.mxu0
  %v107 = vadd.f32 %v71, %v106
  %108 = vmatmul.f32.gmra.mxu0 %v81
  %v109 = vpop.f32.mrf.mxu0
  %v110 = vadd.f32 %v71, %v109
  %111 = vmatmul.f32.gmra.mxu0 %v84
  %v112 = vpop.f32.mrf.mxu0
  %v113 = vadd.f32 %v71, %v112
  %114 = vdwg.mxu0
  %v115 = vmul.f32 %v104, %v104
  %v116 = vmul.f32 %v107, %v107
  %v117 = vmul.f32 %v110, %v110
  %v118 = vmul.f32 %v113, %v113
  %123 = vrot.lane.b32.xlu0 %v115, 32
  %v124 = vpop.permute.xlu0 %123
  %125 = vrot.lane.b32.xlu0 %v116, 32
  %v126 = vpop.permute.xlu0 %125
  %127 = vrot.lane.b32.xlu0 %v117, 32
  %v128 = vpop.permute.xlu0 %127
  %129 = vrot.lane.b32.xlu0 %v118, 32
  %v130 = vpop.permute.xlu0 %129
  %v135 = vsel %vm73, %v104, %v124
  %v136 = vsel %vm73, %v107, %v126
  %v137 = vsel %vm73, %v110, %v128
  %v138 = vsel %vm73, %v113, %v130
  %v140 = vsel %vm73, %v54, 0
  %142 = vmatpush.msra.mxu0 0.0
  %143 = vmatpush.msra.mxu0 0.0
  %144 = vmatpush.msra.mxu0 0.0
  %145 = vmatpush.msra.mxu0 0.0
  %146 = vmatpush.msra.mxu0 0.0
  %147 = vmatpush.msra.mxu0 0.0
  %148 = vmatpush.msra.mxu0 0.0
  %149 = vmatpush.msra.mxu0 0.0
  %150 = vmatpush.msra.mxu0 0.0
  %151 = vmatpush.msra.mxu0 0.0
  %152 = vmatpush.msra.mxu0 0.0
  %153 = vmatpush.msra.mxu0 0.0
  %154 = vmatpush.msra.mxu0 %v138
  %155 = vmatpush.msra.mxu0 %v137
  %156 = vmatpush.msra.mxu0 %v136
  %157 = vmatpush.msra.mxu0 %v135
  %158 = vmatmul.f32.gmra.mxu0 %v140
  %v159 = vpop.f32.mrf.mxu0
  %v160 = vadd.f32 0.0, %v159
  %161 = vdwg.mxu0
  %v162 = vmul.f32 %v160, %v160
  %164 = vrot.lane.b32.xlu0 %v162, 32
  %v165 = vpop.permute.xlu0 %164
  %v167 = vsub.f32 %v160, %v165
  %v168 = vmax.f32 %v167, 0.0
  %v169 = vadd.f32 %v168, 0.001
  %v170 = vrsqrt.pop %v169
  %v171 = vmul.f32 %v170, %v169
  %v172 = vmul.f32 %v171, %v170
  %v173 = vmul.f32 0.5, %v172
  %v174 = vsub.f32 1.5, %v173
  %v175 = vmul.f32 %v170, %v174
  %vm176 = vweird.f32 %v169
  %vm177 = vweird.f32 %v170
  %vm178 = vmor %vm176, %vm177
  %v179 = vsel %vm178, %v170, %v175
  %v181 = vperm.slane %v64, 0
  %182 = vrot.lane.b32.xlu0 %v181, 32
  %v183 = vpop.permute.xlu0 %182
  %v185 = vmul.f32 %v179, %v183
  %187 = vrot.lane.b32.xlu0 %v185, 96
  %v188 = vpop.permute.xlu0 %187
  %v190 = vmul.f32 %v160, %v188
  %v192 = vperm.slane %v65, 0
  %v194 = vsub.f32 %v192, %v190
  %196 = vrot.lane.b32.xlu0 %v194, 32
  %v197 = vpop.permute.xlu0 %196
  %v199 = vsel %vm73, %v188, %v197
  %vm200 = vcmask 31744
  %v202 = vsel %vm200, %v55, 0
  %v205 = vsel %vm200, %v56, 0
  %v208 = vsel %vm200, %v57, 0
  %v211 = vsel %vm200, %v58, 0
  %vm213 = vcmask 1043456
  %v215 = vsel %vm213, %v199, 0
  %217 = vmatpush.msra.mxu0 0.0
  %218 = vmatpush.msra.mxu0 0.0
  %219 = vmatpush.msra.mxu0 0.0
  %220 = vmatpush.msra.mxu0 0.0
  %221 = vmatpush.msra.mxu0 0.0
  %222 = vmatpush.msra.mxu0 0.0
  %223 = vmatpush.msra.mxu0 0.0
  %224 = vmatpush.msra.mxu0 0.0
  %225 = vmatpush.msra.mxu0 0.0
  %226 = vmatpush.msra.mxu0 0.0
  %227 = vmatpush.msra.mxu0 0.0
  %228 = vmatpush.msra.mxu0 0.0
  %229 = vmatpush.msra.mxu0 0.0
  %230 = vmatpush.msra.mxu0 0.0
  %231 = vmatpush.msra.mxu0 0.0
  %232 = vmatpush.msra.mxu0 %v215
  %233 = vmatmul.f32.gmra.mxu0 %v202
  %v234 = vpop.f32.mrf.mxu0
  %v235 = vadd.f32 0.0, %v234
  %236 = vmatmul.f32.gmra.mxu0 %v205
  %v237 = vpop.f32.mrf.mxu0
  %v238 = vadd.f32 0.0, %v237
  %239 = vmatmul.f32.gmra.mxu0 %v208
  %v240 = vpop.f32.mrf.mxu0
  %v241 = vadd.f32 0.0, %v240
  %242 = vmatmul.f32.gmra.mxu0 %v211
  %v243 = vpop.f32.mrf.mxu0
  %v244 = vadd.f32 0.0, %v243
  %245 = vdwg.mxu0
  %v246 = vmul.f32 %v104, %v235
  %v247 = vmul.f32 %v107, %v238
  %v248 = vmul.f32 %v110, %v241
  %v249 = vmul.f32 %v113, %v244
  %254 = vrot.lane.b32.xlu0 %v235, 96
  %v255 = vpop.permute.xlu0 %254
  %256 = vrot.lane.b32.xlu0 %v238, 96
  %v257 = vpop.permute.xlu0 %256
  %258 = vrot.lane.b32.xlu0 %v241, 96
  %v259 = vpop.permute.xlu0 %258
  %260 = vrot.lane.b32.xlu0 %v244, 96
  %v261 = vpop.permute.xlu0 %260
  %v266 = vadd.f32 %v246, %v255
  %v267 = vadd.f32 %v247, %v257
  %v268 = vadd.f32 %v248, %v259
  %v269 = vadd.f32 %v249, %v261
  %v270 = vmul.f32 %v266, 0.01
  %v271 = vmul.f32 %v267, 0.01
  %v272 = vmul.f32 %v268, 0.01
  %v273 = vmul.f32 %v269, 0.01
  %v274 = vmax.f32 %v266, %v270
  %v275 = vmax.f32 %v267, %v271
  %v276 = vmax.f32 %v268, %v272
  %v277 = vmax.f32 %v269, %v273
  %v278 = vmul.f32 %v274, %v66
  %v279 = vmul.f32 %v275, %v67
  %v280 = vmul.f32 %v276, %v68
  %v281 = vmul.f32 %v277, %v69
  %v282 = vld [vmem:[%s5] sm:$0xff]
  %v283 = vld [vmem:[%s5 + $0x8] sm:$0xff]
  %v284 = vld [vmem:[%s5 + $0x10] sm:$0xff]
  %v285 = vld [vmem:[%s5 + $0x18] sm:$0xff]
  %v286 = vld [vmem:[%s6] sm:$0x1]
  %v287 = vld [vmem:[%s7] sm:$0x1]
  %v288 = vld [vmem:[%s8] sm:$0x1]
  %s289 = scalar_lea.vmem %s13, 32
  %v290 = vld [vmem:[%s289] sm:$0xff]
  %v291 = vld [vmem:[%s289 + $0x8] sm:$0xff]
  %v292 = vld [vmem:[%s289 + $0x10] sm:$0xff]
  %v293 = vld [vmem:[%s289 + $0x18] sm:$0xff]
  %v295 = vperm.slane %v286, 0
  %v298 = vsel %vm73, %v278, 0
  %v301 = vsel %vm73, %v279, 0
  %v304 = vsel %vm73, %v280, 0
  %v307 = vsel %vm73, %v281, 0
  %309 = vmatpush.msra.mxu0 0.0
  %310 = vmatpush.msra.mxu0 0.0
  %311 = vmatpush.msra.mxu0 0.0
  %312 = vmatpush.msra.mxu0 0.0
  %313 = vmatpush.msra.mxu0 0.0
  %314 = vmatpush.msra.mxu0 0.0
  %315 = vmatpush.msra.mxu0 0.0
  %316 = vmatpush.msra.mxu0 0.0
  %317 = vmatpush.msra.mxu0 0.0
  %318 = vmatpush.msra.mxu0 0.0
  %319 = vmatpush.msra.mxu0 0.0
  %320 = vmatpush.msra.mxu0 0.0
  %321 = vmatpush.msra.mxu0 %v285
  %322 = vmatpush.msra.mxu0 %v284
  %323 = vmatpush.msra.mxu0 %v283
  %324 = vmatpush.msra.mxu0 %v282
  %325 = vmatmul.f32.gmra.mxu0 %v298
  %v326 = vpop.f32.mrf.mxu0
  %v327 = vadd.f32 %v295, %v326
  %328 = vmatmul.f32.gmra.mxu0 %v301
  %v329 = vpop.f32.mrf.mxu0
  %v330 = vadd.f32 %v295, %v329
  %331 = vmatmul.f32.gmra.mxu0 %v304
  %v332 = vpop.f32.mrf.mxu0
  %v333 = vadd.f32 %v295, %v332
  %334 = vmatmul.f32.gmra.mxu0 %v307
  %v335 = vpop.f32.mrf.mxu0
  %v336 = vadd.f32 %v295, %v335
  %337 = vdwg.mxu0
  %v338 = vmul.f32 %v327, %v327
  %v339 = vmul.f32 %v330, %v330
  %v340 = vmul.f32 %v333, %v333
  %v341 = vmul.f32 %v336, %v336
  %346 = vrot.lane.b32.xlu0 %v338, 32
  %v347 = vpop.permute.xlu0 %346
  %348 = vrot.lane.b32.xlu0 %v339, 32
  %v349 = vpop.permute.xlu0 %348
  %350 = vrot.lane.b32.xlu0 %v340, 32
  %v351 = vpop.permute.xlu0 %350
  %352 = vrot.lane.b32.xlu0 %v341, 32
  %v353 = vpop.permute.xlu0 %352
  %v358 = vsel %vm73, %v327, %v347
  %v359 = vsel %vm73, %v330, %v349
  %v360 = vsel %vm73, %v333, %v351
  %v361 = vsel %vm73, %v336, %v353
  %362 = vmatpush.msra.mxu0 0.0
  %363 = vmatpush.msra.mxu0 0.0
  %364 = vmatpush.msra.mxu0 0.0
  %365 = vmatpush.msra.mxu0 0.0
  %366 = vmatpush.msra.mxu0 0.0
  %367 = vmatpush.msra.mxu0 0.0
  %368 = vmatpush.msra.mxu0 0.0
  %369 = vmatpush.msra.mxu0 0.0
  %370 = vmatpush.msra.mxu0 0.0
  %371 = vmatpush.msra.mxu0 0.0
  %372 = vmatpush.msra.mxu0 0.0
  %373 = vmatpush.msra.mxu0 0.0
  %374 = vmatpush.msra.mxu0 %v361
  %375 = vmatpush.msra.mxu0 %v360
  %376 = vmatpush.msra.mxu0 %v359
  %377 = vmatpush.msra.mxu0 %v358
  %378 = vmatmul.f32.gmra.mxu0 %v140
  %v379 = vpop.f32.mrf.mxu0
  %v380 = vadd.f32 0.0, %v379
  %381 = vdwg.mxu0
  %v382 = vmul.f32 %v380, %v380
  %384 = vrot.lane.b32.xlu0 %v382, 32
  %v385 = vpop.permute.xlu0 %384
  %v387 = vsub.f32 %v380, %v385
  %v388 = vmax.f32 %v387, 0.0
  %v389 = vadd.f32 %v388, 0.001
  %v390 = vrsqrt.pop %v389
  %v391 = vmul.f32 %v390, %v389
  %v392 = vmul.f32 %v391, %v390
  %v393 = vmul.f32 0.5, %v392
  %v394 = vsub.f32 1.5, %v393
  %v395 = vmul.f32 %v390, %v394
  %vm396 = vweird.f32 %v389
  %vm397 = vweird.f32 %v390
  %vm398 = vmor %vm396, %vm397
  %v399 = vsel %vm398, %v390, %v395
  %v401 = vperm.slane %v287, 0
  %402 = vrot.lane.b32.xlu0 %v401, 32
  %v403 = vpop.permute.xlu0 %402
  %v405 = vmul.f32 %v399, %v403
  %407 = vrot.lane.b32.xlu0 %v405, 96
  %v408 = vpop.permute.xlu0 %407
  %v410 = vmul.f32 %v380, %v408
  %v412 = vperm.slane %v288, 0
  %v414 = vsub.f32 %v412, %v410
  %416 = vrot.lane.b32.xlu0 %v414, 32
  %v417 = vpop.permute.xlu0 %416
  %v419 = vsel %vm73, %v408, %v417
  %v421 = vsel %vm213, %v419, 0
  %423 = vmatpush.msra.mxu0 0.0
  %424 = vmatpush.msra.mxu0 0.0
  %425 = vmatpush.msra.mxu0 0.0
  %426 = vmatpush.msra.mxu0 0.0
  %427 = vmatpush.msra.mxu0 0.0
  %428 = vmatpush.msra.mxu0 0.0
  %429 = vmatpush.msra.mxu0 0.0
  %430 = vmatpush.msra.mxu0 0.0
  %431 = vmatpush.msra.mxu0 0.0
  %432 = vmatpush.msra.mxu0 0.0
  %433 = vmatpush.msra.mxu0 0.0
  %434 = vmatpush.msra.mxu0 0.0
  %435 = vmatpush.msra.mxu0 0.0
  %436 = vmatpush.msra.mxu0 0.0
  %437 = vmatpush.msra.mxu0 0.0
  %438 = vmatpush.msra.mxu0 %v421
  %439 = vmatmul.f32.gmra.mxu0 %v202
  %v440 = vpop.f32.mrf.mxu0
  %v441 = vadd.f32 0.0, %v440
  %442 = vmatmul.f32.gmra.mxu0 %v205
  %v443 = vpop.f32.mrf.mxu0
  %v444 = vadd.f32 0.0, %v443
  %445 = vmatmul.f32.gmra.mxu0 %v208
  %v446 = vpop.f32.mrf.mxu0
  %v447 = vadd.f32 0.0, %v446
  %448 = vmatmul.f32.gmra.mxu0 %v211
  %v449 = vpop.f32.mrf.mxu0
  %v450 = vadd.f32 0.0, %v449
  %451 = vdwg.mxu0
  %v452 = vmul.f32 %v327, %v441
  %v453 = vmul.f32 %v330, %v444
  %v454 = vmul.f32 %v333, %v447
  %v455 = vmul.f32 %v336, %v450
  %460 = vrot.lane.b32.xlu0 %v441, 96
  %v461 = vpop.permute.xlu0 %460
  %462 = vrot.lane.b32.xlu0 %v444, 96
  %v463 = vpop.permute.xlu0 %462
  %464 = vrot.lane.b32.xlu0 %v447, 96
  %v465 = vpop.permute.xlu0 %464
  %466 = vrot.lane.b32.xlu0 %v450, 96
  %v467 = vpop.permute.xlu0 %466
  %v472 = vadd.f32 %v452, %v461
  %v473 = vadd.f32 %v453, %v463
  %v474 = vadd.f32 %v454, %v465
  %v475 = vadd.f32 %v455, %v467
  %v476 = vmul.f32 %v472, 0.01
  %v477 = vmul.f32 %v473, 0.01
  %v478 = vmul.f32 %v474, 0.01
  %v479 = vmul.f32 %v475, 0.01
  %v480 = vmax.f32 %v472, %v476
  %v481 = vmax.f32 %v473, %v477
  %v482 = vmax.f32 %v474, %v478
  %v483 = vmax.f32 %v475, %v479
  %v484 = vmul.f32 %v480, %v290
  %v485 = vmul.f32 %v481, %v291
  %v486 = vmul.f32 %v482, %v292
  %v487 = vmul.f32 %v483, %v293
  %s488 = scalar_lea.vmem %s13, 64
  %v489 = vld [vmem:[%s488] sm:$0xff]
  %v490 = vld [vmem:[%s488 + $0x8] sm:$0xff]
  %v491 = vld [vmem:[%s488 + $0x10] sm:$0xff]
  %v492 = vld [vmem:[%s488 + $0x18] sm:$0xff]
  %v494 = vsel %vm73, %v484, 0
  %v497 = vsel %vm73, %v485, 0
  %v500 = vsel %vm73, %v486, 0
  %v503 = vsel %vm73, %v487, 0
  %505 = vmatpush.msra.mxu0 0.0
  %506 = vmatpush.msra.mxu0 0.0
  %507 = vmatpush.msra.mxu0 0.0
  %508 = vmatpush.msra.mxu0 0.0
  %509 = vmatpush.msra.mxu0 0.0
  %510 = vmatpush.msra.mxu0 0.0
  %511 = vmatpush.msra.mxu0 0.0
  %512 = vmatpush.msra.mxu0 0.0
  %513 = vmatpush.msra.mxu0 0.0
  %514 = vmatpush.msra.mxu0 0.0
  %515 = vmatpush.msra.mxu0 0.0
  %516 = vmatpush.msra.mxu0 0.0
  %517 = vmatpush.msra.mxu0 %v285
  %518 = vmatpush.msra.mxu0 %v284
  %519 = vmatpush.msra.mxu0 %v283
  %520 = vmatpush.msra.mxu0 %v282
  %521 = vmatmul.f32.gmra.mxu0 %v494
  %v522 = vpop.f32.mrf.mxu0
  %v523 = vadd.f32 %v295, %v522
  %524 = vmatmul.f32.gmra.mxu0 %v497
  %v525 = vpop.f32.mrf.mxu0
  %v526 = vadd.f32 %v295, %v525
  %527 = vmatmul.f32.gmra.mxu0 %v500
  %v528 = vpop.f32.mrf.mxu0
  %v529 = vadd.f32 %v295, %v528
  %530 = vmatmul.f32.gmra.mxu0 %v503
  %v531 = vpop.f32.mrf.mxu0
  %v532 = vadd.f32 %v295, %v531
  %533 = vdwg.mxu0
  %v534 = vmul.f32 %v523, %v523
  %v535 = vmul.f32 %v526, %v526
  %v536 = vmul.f32 %v529, %v529
  %v537 = vmul.f32 %v532, %v532
  %542 = vrot.lane.b32.xlu0 %v534, 32
  %v543 = vpop.permute.xlu0 %542
  %544 = vrot.lane.b32.xlu0 %v535, 32
  %v545 = vpop.permute.xlu0 %544
  %546 = vrot.lane.b32.xlu0 %v536, 32
  %v547 = vpop.permute.xlu0 %546
  %548 = vrot.lane.b32.xlu0 %v537, 32
  %v549 = vpop.permute.xlu0 %548
  %v554 = vsel %vm73, %v523, %v543
  %v555 = vsel %vm73, %v526, %v545
  %v556 = vsel %vm73, %v529, %v547
  %v557 = vsel %vm73, %v532, %v549
  %558 = vmatpush.msra.mxu0 0.0
  %559 = vmatpush.msra.mxu0 0.0
  %560 = vmatpush.msra.mxu0 0.0
  %561 = vmatpush.msra.mxu0 0.0
  %562 = vmatpush.msra.mxu0 0.0
  %563 = vmatpush.msra.mxu0 0.0
  %564 = vmatpush.msra.mxu0 0.0
  %565 = vmatpush.msra.mxu0 0.0
  %566 = vmatpush.msra.mxu0 0.0
  %567 = vmatpush.msra.mxu0 0.0
  %568 = vmatpush.msra.mxu0 0.0
  %569 = vmatpush.msra.mxu0 0.0
  %570 = vmatpush.msra.mxu0 %v557
  %571 = vmatpush.msra.mxu0 %v556
  %572 = vmatpush.msra.mxu0 %v555
  %573 = vmatpush.msra.mxu0 %v554
  %574 = vmatmul.f32.gmra.mxu0 %v140
  %v575 = vpop.f32.mrf.mxu0
  %v576 = vadd.f32 0.0, %v575
  %577 = vdwg.mxu0
  %v578 = vmul.f32 %v576, %v576
  %580 = vrot.lane.b32.xlu0 %v578, 32
  %v581 = vpop.permute.xlu0 %580
  %v583 = vsub.f32 %v576, %v581
  %v584 = vmax.f32 %v583, 0.0
  %v585 = vadd.f32 %v584, 0.001
  %v586 = vrsqrt.pop %v585
  %v587 = vmul.f32 %v586, %v585
  %v588 = vmul.f32 %v587, %v586
  %v589 = vmul.f32 0.5, %v588
  %v590 = vsub.f32 1.5, %v589
  %v591 = vmul.f32 %v586, %v590
  %vm592 = vweird.f32 %v585
  %vm593 = vweird.f32 %v586
  %vm594 = vmor %vm592, %vm593
  %v595 = vsel %vm594, %v586, %v591
  %v596 = vmul.f32 %v595, %v403
  %598 = vrot.lane.b32.xlu0 %v596, 96
  %v599 = vpop.permute.xlu0 %598
  %v601 = vmul.f32 %v576, %v599
  %v602 = vsub.f32 %v412, %v601
  %604 = vrot.lane.b32.xlu0 %v602, 32
  %v605 = vpop.permute.xlu0 %604
  %v607 = vsel %vm73, %v599, %v605
  %v609 = vsel %vm213, %v607, 0
  %611 = vmatpush.msra.mxu0 0.0
  %612 = vmatpush.msra.mxu0 0.0
  %613 = vmatpush.msra.mxu0 0.0
  %614 = vmatpush.msra.mxu0 0.0
  %615 = vmatpush.msra.mxu0 0.0
  %616 = vmatpush.msra.mxu0 0.0
  %617 = vmatpush.msra.mxu0 0.0
  %618 = vmatpush.msra.mxu0 0.0
  %619 = vmatpush.msra.mxu0 0.0
  %620 = vmatpush.msra.mxu0 0.0
  %621 = vmatpush.msra.mxu0 0.0
  %622 = vmatpush.msra.mxu0 0.0
  %623 = vmatpush.msra.mxu0 0.0
  %624 = vmatpush.msra.mxu0 0.0
  %625 = vmatpush.msra.mxu0 0.0
  %626 = vmatpush.msra.mxu0 %v609
  %627 = vmatmul.f32.gmra.mxu0 %v202
  %v628 = vpop.f32.mrf.mxu0
  %v629 = vadd.f32 0.0, %v628
  %630 = vmatmul.f32.gmra.mxu0 %v205
  %v631 = vpop.f32.mrf.mxu0
  %v632 = vadd.f32 0.0, %v631
  %633 = vmatmul.f32.gmra.mxu0 %v208
  %v634 = vpop.f32.mrf.mxu0
  %v635 = vadd.f32 0.0, %v634
  %636 = vmatmul.f32.gmra.mxu0 %v211
  %v637 = vpop.f32.mrf.mxu0
  %v638 = vadd.f32 0.0, %v637
  %639 = vdwg.mxu0
  %v640 = vmul.f32 %v523, %v629
  %v641 = vmul.f32 %v526, %v632
  %v642 = vmul.f32 %v529, %v635
  %v643 = vmul.f32 %v532, %v638
  %648 = vrot.lane.b32.xlu0 %v629, 96
  %v649 = vpop.permute.xlu0 %648
  %650 = vrot.lane.b32.xlu0 %v632, 96
  %v651 = vpop.permute.xlu0 %650
  %652 = vrot.lane.b32.xlu0 %v635, 96
  %v653 = vpop.permute.xlu0 %652
  %654 = vrot.lane.b32.xlu0 %v638, 96
  %v655 = vpop.permute.xlu0 %654
  %v660 = vadd.f32 %v640, %v649
  %v661 = vadd.f32 %v641, %v651
  %v662 = vadd.f32 %v642, %v653
  %v663 = vadd.f32 %v643, %v655
  %v664 = vmul.f32 %v660, 0.01
  %v665 = vmul.f32 %v661, 0.01
  %v666 = vmul.f32 %v662, 0.01
  %v667 = vmul.f32 %v663, 0.01
  %v668 = vmax.f32 %v660, %v664
  %v669 = vmax.f32 %v661, %v665
  %v670 = vmax.f32 %v662, %v666
  %v671 = vmax.f32 %v663, %v667
  %v672 = vmul.f32 %v668, %v489
  %v673 = vmul.f32 %v669, %v490
  %v674 = vmul.f32 %v670, %v491
  %v675 = vmul.f32 %v671, %v492
  %v676 = vld [vmem:[%s9] sm:$0xff]
  %v677 = vld [vmem:[%s9 + $0x8] sm:$0xff]
  %v678 = vld [vmem:[%s9 + $0x10] sm:$0xff]
  %v679 = vld [vmem:[%s9 + $0x18] sm:$0xff]
  %v680 = vld [vmem:[%s10] sm:$0x1]
  %v682 = vperm.slane %v680, 0
  %v685 = vsel %vm73, %v672, 0
  %v688 = vsel %vm73, %v673, 0
  %v691 = vsel %vm73, %v674, 0
  %v694 = vsel %vm73, %v675, 0
  %696 = vmatpush.msra.mxu0 0.0
  %697 = vmatpush.msra.mxu0 0.0
  %698 = vmatpush.msra.mxu0 0.0
  %699 = vmatpush.msra.mxu0 0.0
  %700 = vmatpush.msra.mxu0 0.0
  %701 = vmatpush.msra.mxu0 0.0
  %702 = vmatpush.msra.mxu0 0.0
  %703 = vmatpush.msra.mxu0 0.0
  %704 = vmatpush.msra.mxu0 0.0
  %705 = vmatpush.msra.mxu0 0.0
  %706 = vmatpush.msra.mxu0 0.0
  %707 = vmatpush.msra.mxu0 0.0
  %708 = vmatpush.msra.mxu0 %v679
  %709 = vmatpush.msra.mxu0 %v678
  %710 = vmatpush.msra.mxu0 %v677
  %711 = vmatpush.msra.mxu0 %v676
  %712 = vmatmul.f32.gmra.mxu0 %v685
  %v713 = vpop.f32.mrf.mxu0
  %v714 = vadd.f32 %v682, %v713
  %715 = vmatmul.f32.gmra.mxu0 %v688
  %v716 = vpop.f32.mrf.mxu0
  %v717 = vadd.f32 %v682, %v716
  %718 = vmatmul.f32.gmra.mxu0 %v691
  %v719 = vpop.f32.mrf.mxu0
  %v720 = vadd.f32 %v682, %v719
  %721 = vmatmul.f32.gmra.mxu0 %v694
  %v722 = vpop.f32.mrf.mxu0
  %v723 = vadd.f32 %v682, %v722
  %724 = vdwg.mxu0
  %v725 = vmul.f32 %v714, 1.442695
  %v726 = vpow.pop %v725
  %v727 = vmul.f32 %v717, 1.442695
  %v728 = vpow.pop %v727
  %v729 = vmul.f32 %v720, 1.442695
  %v730 = vpow.pop %v729
  %v731 = vmul.f32 %v723, 1.442695
  %v732 = vpow.pop %v731
  %v733 = vadd.f32 %v726, 0.0001
  %v734 = vadd.f32 %v728, 0.0001
  %v735 = vadd.f32 %v730, 0.0001
  %v736 = vadd.f32 %v732, 0.0001
  %v737 = vrsqrt.pop %v733
  %v738 = vmul.f32 %v737, %v733
  %v739 = vmul.f32 %v738, %v737
  %v740 = vmul.f32 0.5, %v739
  %v741 = vsub.f32 1.5, %v740
  %v742 = vmul.f32 %v737, %v741
  %v743 = vmul.f32 %v733, %v742
  %vm744 = vcmp.eq.f32.partialorder %v733, inf
  %v745 = vsel %vm744, %v733, %v743
  %vm746 = vcmp.eq.f32.partialorder %v733, 0.0
  %v747 = vand.u32 %v733, 2147483648
  %v748 = vsel %vm746, %v747, %v745
  %v749 = vrsqrt.pop %v734
  %v750 = vmul.f32 %v749, %v734
  %v751 = vmul.f32 %v750, %v749
  %v752 = vmul.f32 0.5, %v751
  %v753 = vsub.f32 1.5, %v752
  %v754 = vmul.f32 %v749, %v753
  %v755 = vmul.f32 %v734, %v754
  %vm756 = vcmp.eq.f32.partialorder %v734, inf
  %v757 = vsel %vm756, %v734, %v755
  %vm758 = vcmp.eq.f32.partialorder %v734, 0.0
  %v759 = vand.u32 %v734, 2147483648
  %v760 = vsel %vm758, %v759, %v757
  %v761 = vrsqrt.pop %v735
  %v762 = vmul.f32 %v761, %v735
  %v763 = vmul.f32 %v762, %v761
  %v764 = vmul.f32 0.5, %v763
  %v765 = vsub.f32 1.5, %v764
  %v766 = vmul.f32 %v761, %v765
  %v767 = vmul.f32 %v735, %v766
  %vm768 = vcmp.eq.f32.partialorder %v735, inf
  %v769 = vsel %vm768, %v735, %v767
  %vm770 = vcmp.eq.f32.partialorder %v735, 0.0
  %v771 = vand.u32 %v735, 2147483648
  %v772 = vsel %vm770, %v771, %v769
  %v773 = vrsqrt.pop %v736
  %v774 = vmul.f32 %v773, %v736
  %v775 = vmul.f32 %v774, %v773
  %v776 = vmul.f32 0.5, %v775
  %v777 = vsub.f32 1.5, %v776
  %v778 = vmul.f32 %v773, %v777
  %v779 = vmul.f32 %v736, %v778
  %vm780 = vcmp.eq.f32.partialorder %v736, inf
  %v781 = vsel %vm780, %v736, %v779
  %vm782 = vcmp.eq.f32.partialorder %v736, 0.0
  %v783 = vand.u32 %v736, 2147483648
  %v784 = vsel %vm782, %v783, %v781
  %v785 = vld [vmem:[%s14] sm:$0xff]
  %v786 = vld [vmem:[%s14 + $0x8] sm:$0xff]
  %v787 = vld [vmem:[%s14 + $0x10] sm:$0xff]
  %v788 = vld [vmem:[%s14 + $0x18] sm:$0xff]
  %793 = vrot.lane.b32.xlu0 %v785, 16
  %v794 = vpop.permute.xlu0 %793
  %795 = vrot.lane.b32.xlu0 %v786, 16
  %v796 = vpop.permute.xlu0 %795
  %797 = vrot.lane.b32.xlu0 %v787, 16
  %v798 = vpop.permute.xlu0 %797
  %799 = vrot.lane.b32.xlu0 %v788, 16
  %v800 = vpop.permute.xlu0 %799
  %v805 = vmul.f32 %v748, %v794
  %v806 = vmul.f32 %v760, %v796
  %v807 = vmul.f32 %v772, %v798
  %v808 = vmul.f32 %v784, %v800
  %813 = vrot.lane.b32.xlu0 %v805, 112
  %v814 = vpop.permute.xlu0 %813
  %815 = vrot.lane.b32.xlu0 %v806, 112
  %v816 = vpop.permute.xlu0 %815
  %817 = vrot.lane.b32.xlu0 %v807, 112
  %v818 = vpop.permute.xlu0 %817
  %819 = vrot.lane.b32.xlu0 %v808, 112
  %v820 = vpop.permute.xlu0 %819
  %v825 = vadd.f32 %v714, %v814
  %v826 = vadd.f32 %v717, %v816
  %v827 = vadd.f32 %v720, %v818
  %v828 = vadd.f32 %v723, %v820
  %833 = vrot.lane.b32.xlu0 %v825, 32
  %v834 = vpop.permute.xlu0 %833
  %835 = vrot.lane.b32.xlu0 %v826, 32
  %v836 = vpop.permute.xlu0 %835
  %837 = vrot.lane.b32.xlu0 %v827, 32
  %v838 = vpop.permute.xlu0 %837
  %839 = vrot.lane.b32.xlu0 %v828, 32
  %v840 = vpop.permute.xlu0 %839
  %vm845 = vcmask 130048
  %v846 = vsel %vm845, %v714, %v733
  %v847 = vsel %vm845, %v717, %v734
  %v848 = vsel %vm845, %v720, %v735
  %v849 = vsel %vm845, %v723, %v736
  %v850 = vsel %vm73, %v846, %v834
  %v851 = vsel %vm73, %v847, %v836
  %v852 = vsel %vm73, %v848, %v838
  %v853 = vsel %vm73, %v849, %v840
  %vm854 = vcmask 392192
  %855 = vst.msk [vmem:[%s15] sm:$0xff] %vm854, %v850
  %856 = vst.msk [vmem:[%s15 + $0x8] sm:$0xff] %vm854, %v851
  %857 = vst.msk [vmem:[%s15 + $0x10] sm:$0xff] %vm854, %v852
  %858 = vst.msk [vmem:[%s15 + $0x18] sm:$0xff] %vm854, %v853
  // Predicated region
  $region62: #{vidr_encoder_forward.1} parent=0 // pred_check
    _
  $region63: #{vidr_encoder_forward.1} parent=0 // pred_check_branch
    %860 = sbr.rel (0) target = $region65
  $region64: #{vidr_encoder_forward.1} parent=0 // pred_region
    _
  $region65: #{vidr_encoder_forward.1} parent=0 // pred_fallthru
    _
  // Predicated region
  $region66: #{vidr_encoder_forward.1} parent=0 // pred_check
    _
  $region67: #{vidr_encoder_forward.1} parent=0 // pred_check_branch
    %862 = sbr.rel (0) target = $region69
  $region68: #{vidr_encoder_forward.1} parent=0 // pred_region
    _
  $region69: #{vidr_encoder_forward.1} parent=0 // pred_fallthru
    _

</llo_original>
